<compile_context>
chip_gen: v7x
topology: tpu7x:2x2x1
jax: 0.10.0
libtpu: 0.0.40
codegen_flags: <defaults>
</compile_context>

<pallas_src>
import functools

import jax
import jax.numpy as jnp
from jax.experimental import pallas as pl
from jax.experimental.pallas import tpu as pltpu

_EPS = 1e-12  # matches torch.nn.functional.normalize default eps


def _cosface_kernel(xn_ref, wn_ref, lbl_ref, o_ref, *, s, m, tile_n):
    """One (tile_m, tile_n) output tile of s * (cosine - m * one_hot)."""
    # xn_ref: (TM, D) bf16, rows already L2-normalized (exact f32 norms).
    # wn_ref: (TN, D) bf16, rows already L2-normalized (exact f32 norms).
    cos = jax.lax.dot_general(
        xn_ref[...], wn_ref[...],
        dimension_numbers=(((1,), (1,)), ((), ())),   # contract D of both
        preferred_element_type=jnp.float32,
    )                                                 # (TM, TN) f32 cosine

    # CosFace margin: subtract m only at each row's label column.
    col = (jax.lax.broadcasted_iota(jnp.int32, cos.shape, 1)
           + pl.program_id(1) * tile_n)
    is_target = col == lbl_ref[...]                   # (TM, 1) int32, broadcasts
    o_ref[...] = (jnp.where(is_target, cos - m, cos) * s).astype(o_ref.dtype)


def _round_up(v, mult):
    return (v + mult - 1) // mult * mult


def _vmem_cap_bytes():
    # 3/4 of physical VMEM of the running chip; safe fallback is the v7x budget.
    try:
        info = pltpu.get_tpu_info()
        cap = int(getattr(info, "vmem_capacity_bytes")) * 3 // 4
        if cap > 0:
            return cap
    except Exception:
        pass
    return 48 << 20


@functools.partial(jax.jit, static_argnames=("s", "m", "tile_m", "tile_n"))
def cosface(x, weight, label, *, s=64.0, m=0.35, tile_m=256, tile_n=512):
    """CosFace forward.

    x:      (B, D) float32 embeddings
    weight: (N, D) float32 class weights (PyTorch nn.Linear layout, NOT transposed)
    label:  (B,)   int     ground-truth class indices
    returns (B, N) float32 scaled margin logits
    """
    B, D = x.shape
    N, D2 = weight.shape
    assert D == D2, "weight must be (out_features, in_features)"

    # Exact f32 L2 normalization once in the wrapper, then bf16 for the MXU
    # stream (halves the dominant weight-read HBM traffic; no in-kernel norms).
    xn = x / jnp.maximum(
        jnp.sqrt(jnp.sum(x * x, axis=1, keepdims=True)), _EPS)
    wn = weight / jnp.maximum(
        jnp.sqrt(jnp.sum(weight * weight, axis=1, keepdims=True)), _EPS)
    xn = xn.astype(jnp.bfloat16)
    wn = wn.astype(jnp.bfloat16)
    # TODO(synk): in a real training loop, cache the normalized bf16 weight
    # across calls instead of recomputing it per forward.

    # --- tile selection -----------------------------------------------------
    # Batch tiles: make x fully resident when it fits so the weight matrix is
    # streamed exactly once.  Multiple of 16 (bf16 sublane packing).
    tile_m = min(tile_m, _round_up(B, 16))
    tile_m = max(tile_m, 16)
    Bp = _round_up(B, tile_m)

    # Class tiles: lane-dense, multiple of 128 (256-friendly defaults).
    tile_n = min(tile_n, _round_up(N, 128))
    Np = _round_up(N, tile_n)
    if Np // tile_n < 2 and Np >= 256:
        # Guarantee >= 2 blocks along a "parallel" axis so v7x can shard the
        # grid across both TensorCores (no-op on v5e/v6e).
        tile_n = _round_up(Np // 2, 128)
        Np = _round_up(N, tile_n)

    if Bp != B:
        xn = jnp.pad(xn, ((0, Bp - B), (0, 0)))
        label = jnp.pad(label, (0, Bp - B))
    if Np != N:
        wn = jnp.pad(wn, ((0, Np - N), (0, 0)))
    lbl2d = label.astype(jnp.int32).reshape(Bp, 1)

    grid_i = Bp // tile_m
    grid_j = Np // tile_n
    grid = (grid_i, grid_j)

    # --- VMEM budget ----------------------------------------------------------
    block_bytes = (tile_m * D * 2          # xn block (bf16)
                   + tile_n * D * 2        # wn block (bf16)
                   + tile_m * 4            # labels
                   + tile_m * tile_n * 4)  # f32 output tile
    vmem_limit = int(min(max(2 * block_bytes + (4 << 20), 8 << 20),
                         _vmem_cap_bytes()))

    # Actual traffic: x/labels once per batch tile, weight re-read grid_i times,
    # full f32 output written once.
    cost = pl.CostEstimate(
        flops=2 * Bp * D * Np,
        transcendentals=0,
        bytes_accessed=(Bp * D * 2
                        + grid_i * Np * D * 2
                        + Bp * 4
                        + Bp * Np * 4),
    )

    out = pl.pallas_call(
        functools.partial(_cosface_kernel, s=s, m=m, tile_n=tile_n),
        out_shape=jax.ShapeDtypeStruct((Bp, Np), jnp.float32),
        grid_spec=pltpu.PrefetchScalarGridSpec(
            num_scalar_prefetch=0,
            grid=grid,
            in_specs=[
                pl.BlockSpec((tile_m, D), lambda i, j: (i, 0)),   # x rows (resident over j)
                pl.BlockSpec((tile_n, D), lambda i, j: (j, 0)),   # weight rows (streamed)
                pl.BlockSpec((tile_m, 1), lambda i, j: (i, 0)),   # labels
            ],
            out_specs=pl.BlockSpec((tile_m, tile_n), lambda i, j: (i, j)),
        ),
        compiler_params=pltpu.CompilerParams(
            dimension_semantics=("parallel", "parallel"),
            vmem_limit_bytes=vmem_limit,
        ),
        cost_estimate=cost,
    )(xn, wn, lbl2d)

    return out[:B, :N]


def _reference(x, weight, label, s=64.0, m=0.35):
    xn = x / jnp.maximum(jnp.linalg.norm(x, axis=1, keepdims=True), _EPS)
    wn = weight / jnp.maximum(jnp.linalg.norm(weight, axis=1, keepdims=True), _EPS)
    cosine = xn @ wn.T
    one_hot = jax.nn.one_hot(label, weight.shape[0], dtype=cosine.dtype)
    return (one_hot * (cosine - m) + (1.0 - one_hot) * cosine) * s


if __name__ == "__main__":
    # Small shapes consistent with the module: batch=16 embeddings of dim 256,
    # 512 identity classes.
    B, D, N = 16, 256, 512

    key = jax.random.PRNGKey(0)
    kx, kw, kl = jax.random.split(key, 3)

    x = jax.random.normal(kx, (B, D), dtype=jnp.float32)
    # Xavier-uniform init, as in the PyTorch module.
    lim = (6.0 / (N + D)) ** 0.5
    weight = jax.random.uniform(kw, (N, D), jnp.float32, -lim, lim)
    label = jax.random.randint(kl, (B,), 0, N, dtype=jnp.int32)

    out = cosface(x, weight, label, s=64.0, m=0.35)
    out = jax.block_until_ready(out)

    ref = _reference(x, weight, label, s=64.0, m=0.35)
    assert out.shape == (B, N)
    # bf16 MXU operands / f32 accumulation: cosine error ~1e-3, scaled by s=64.
    max_err = float(jnp.max(jnp.abs(out - ref)))
    assert max_err < 0.5, f"mismatch vs reference: max abs err {max_err}"

    print("KERNEL_OK")
</pallas_src>

<mosaic_0001>
module attributes {stable_mosaic.version = 11 : i64} {
  func.func @_cosface_kernel(%arg0: i32, %arg1: i32, %arg2: memref<16x256xbf16, #tpu.memory_space<vmem>>, %arg3: memref<256x256xbf16, #tpu.memory_space<vmem>>, %arg4: memref<16x1xi32, #tpu.memory_space<vmem>>, %arg5: memref<16x256xf32, #tpu.memory_space<vmem>>) attributes {dimension_semantics = [#tpu.dimension_semantics<parallel>, #tpu.dimension_semantics<parallel>], iteration_bounds = array<i64: 1, 2>, scalar_prefetch = 0 : i64, scratch_operands = 0 : i64, tpu.core_type = #tpu.core_type<tc>, window_params = [{transform_indices = @transform_0, window_bounds = array<i64: 16, 256>}, {transform_indices = @transform_1, window_bounds = array<i64: 256, 256>}, {transform_indices = @transform_2, window_bounds = array<i64: 16, 1>}, {transform_indices = @transform_3, window_bounds = array<i64: 16, 256>}]} {
    %c0 = arith.constant 0 : index
    %c0_0 = arith.constant 0 : index
    %0 = vector.load %arg2[%c0, %c0_0] : memref<16x256xbf16, #tpu.memory_space<vmem>>, vector<16x256xbf16>
    %c0_1 = arith.constant 0 : index
    %c0_2 = arith.constant 0 : index
    %1 = vector.load %arg3[%c0_1, %c0_2] : memref<256x256xbf16, #tpu.memory_space<vmem>>, vector<256x256xbf16>
    %cst = arith.constant dense<0.000000e+00> : vector<16x256xf32>
    %2 = tpu.matmul %0, %1, %cst {dimension_numbers = #tpu.dot_dimension_numbers<[1], [1], [0], [0], [0, 0, 1, 0], [], []>} : vector<16x256xbf16>, vector<256x256xbf16>, vector<16x256xf32> -> vector<16x256xf32>
    %3 = tpu.iota {dimensions = array<i32: 1>} : vector<16x256xi32>
    %c256_i32 = arith.constant 256 : i32
    %4 = arith.muli %arg1, %c256_i32 : i32
    %5 = vector.broadcast %4 : i32 to vector<16x256xi32>
    %6 = arith.addi %3, %5 : vector<16x256xi32>
    %c0_3 = arith.constant 0 : index
    %c0_4 = arith.constant 0 : index
    %7 = vector.load %arg4[%c0_3, %c0_4] : memref<16x1xi32, #tpu.memory_space<vmem>>, vector<16x1xi32>
    %8 = vector.broadcast %7 : vector<16x1xi32> to vector<16x256xi32>
    %9 = arith.cmpi eq, %6, %8 : vector<16x256xi32>
    %cst_5 = arith.constant 3.500000e-01 : f32
    %10 = vector.broadcast %cst_5 : f32 to vector<16x256xf32>
    %11 = arith.subf %2, %10 : vector<16x256xf32>
    %12 = arith.select %9, %11, %2 : vector<16x256xi1>, vector<16x256xf32>
    %cst_6 = arith.constant 6.400000e+01 : f32
    %13 = vector.broadcast %cst_6 : f32 to vector<16x256xf32>
    %14 = arith.mulf %12, %13 : vector<16x256xf32>
    %c0_7 = arith.constant 0 : index
    %c0_8 = arith.constant 0 : index
    %15 = vector.load %arg5[%c0_7, %c0_8] : memref<16x256xf32, #tpu.memory_space<vmem>>, vector<16x256xf32>
    tpu.vector_store %arg5[%c0_7, %c0_8], %14 {strides = array<i32>} : memref<16x256xf32, #tpu.memory_space<vmem>>, vector<16x256xf32>,
    return
  }
  func.func @transform_0(%arg0: i32, %arg1: i32) -> (i32, i32) {
    %c0_i32 = arith.constant 0 : i32
    %c0_i32_0 = arith.constant 0 : i32
    return %arg0, %c0_i32 : i32, i32
  }
  func.func @transform_1(%arg0: i32, %arg1: i32) -> (i32, i32) {
    %c0_i32 = arith.constant 0 : i32
    %c0_i32_0 = arith.constant 0 : i32
    return %arg1, %c0_i32 : i32, i32
  }
  func.func @transform_2(%arg0: i32, %arg1: i32) -> (i32, i32) {
    %c0_i32 = arith.constant 0 : i32
    %c0_i32_0 = arith.constant 0 : i32
    return %arg0, %c0_i32 : i32, i32
  }
  func.func @transform_3(%arg0: i32, %arg1: i32) -> (i32, i32) {
    %c0_i32 = arith.constant 0 : i32
    return %arg0, %arg1 : i32, i32
  }
}

</mosaic_0001>

<llo_original>
// kernel: cosface.1
$region0: #{cosface.1}
  #allocation0 [shape = 'u32[]', space=smem, size = 0x4, offset = 0x4, fixed_abs, tag = 'smem constant byte address 0x4 - core index']
  #allocation1 [shape = 'u32[144,128]{1,0:T(1,128)}', space=vmem, size = 0x12000, scoped, tag = 'internal scratch']
  %s0 = inlined_call_operand.vmem [shape: bf16[16,256], index: 0, kind: input, shape index: {}]
  %s1 = inlined_call_operand.vmem [shape: bf16[512,256], index: 1, kind: input, shape index: {}]
  %s2 = inlined_call_operand.vmem [shape: s32[16,1], index: 2, kind: input, shape index: {}]
  %s3 = inlined_call_operand.hbm [shape: f32[16,512], index: 3, kind: output, shape index: {}]
  %s4 = sld [smem:[#allocation0]]
  $region45: #{cosface.1} parent=0
    _
  %s6 = ssub.s32 1, %s4
  %s7 = scalar_select 0, %s6, %s4
  $region1: #{cosface.1} parent=0
    #allocation2 [shape = 'u8[32768]{0}', space=vmem, size = 0x8000, scoped, tag = 'output window, operand 0']
    #allocation3 [shape = 's32[2]{0}', space=sflag, size = 0x8, scoped, tag = 'scoped memory for cosface.1']
    %8 = vsyncpa [#allocation3], 0
    %s9 = scalar_lea.sflag [#allocation3], 1
    %10 = vsyncpa %s9, 0
    loop: start=0, step=1, limit=4
    $region2: #{cosface.1} parent=1 // loop_pre_header
      _
    $region3: #{cosface.1} parent=1 // loop_header
      %s12 = sphi 0, %s16
      %p13 = scmp.ge.s32.totalorder %s12, 4
      %s19 = sphi 0, %s31
      %s20 = sphi 0, %s27
      %s21 = sphi 0, %s19
      %s22 = sphi 0, %s20
      %s23 = sphi 0, %s21
      %s24 = sphi 0, %s22
      %s34 = sphi 0, %s36
      %s37 = sphi 0, %s34
      %s38 = sphi 0, %s37
      %s54 = sphi 0, %s38
      %s60 = sphi 0, %s62
      %s63 = sphi 0, %s60
      %s64 = sphi 0, %s63
      %s80 = sphi 0, %s64
      %s86 = sphi 0, %s88
      %s89 = sphi 0, %s86
      %s90 = sphi 0, %s89
      %s106 = sphi 0, %s90
      %s114 = sphi 0, %s116
      %s117 = sphi 0, %s114
      %s118 = sphi 0, %s117
      %s134 = sphi 0, %s118
    $region4: #{cosface.1} parent=1 // loop_header_branch
      %15 = sbr.rel (%p13) target = $region8
    $region5: #{cosface.1} parent=1 // loop_body
      %s17 = ssub.s32 %s12, 1
      %s18 = ssub.s32 %s12, 2
      %s25 = sadd.s32 1, %s20
      %p26 = scmp.ge.s32.totalorder %s25, 2
      %s27 = scalar_select %p26, 0, %s25
      %s28 = sadd.s32 1, %s19
      %s29 = scalar_select %p26, %s28, %s19
      %p30 = scmp.ge.s32.totalorder %s29, 1
      %s31 = scalar_select %p30, 0, %s29
      %s32 = ssub.s32 %s19, %s31
      %p33 = scmp.eq.s32.totalorder %s32, 0
      %s35 = sadd.s32 %s34, 1
      %s36 = scalar_select %p33, %s34, %s35
      %p39 = pneg %p33
      %p40 = scmp.eq.s32.totalorder %s12, 1
      %p41 = por %p39, %p40
      %p42 = scmp.ne.s32.totalorder %s34, %s37
      %p43 = scmp.eq.s32.totalorder %s12, 0
      %p44 = por %p42, %p43
      %p45 = scmp.ne.s32.totalorder %s34, %s37
      %p46 = scmp.eq.s32.totalorder %s17, 1
      %p47 = por %p45, %p46
      %p48 = scmp.ne.s32.totalorder %s37, %s38
      %p49 = scmp.eq.s32.totalorder %s17, 0
      %p50 = por %p48, %p49
      %p51 = scmp.ne.s32.totalorder %s37, %s38
      %p52 = scmp.eq.s32.totalorder %s18, 1
      %p53 = por %p51, %p52
      %p55 = scmp.ne.s32.totalorder %s38, %s54
      %p56 = scmp.eq.s32.totalorder %s18, 0
      %p57 = por %p55, %p56
      %s58 = ssub.s32 %s20, %s27
      %p59 = scmp.eq.s32.totalorder %s58, 0
      %s61 = sadd.s32 %s60, 1
      %s62 = scalar_select %p59, %s60, %s61
      %p65 = pneg %p59
      %p66 = scmp.eq.s32.totalorder %s12, 1
      %p67 = por %p65, %p66
      %p68 = scmp.ne.s32.totalorder %s60, %s63
      %p69 = scmp.eq.s32.totalorder %s12, 0
      %p70 = por %p68, %p69
      %p71 = scmp.ne.s32.totalorder %s60, %s63
      %p72 = scmp.eq.s32.totalorder %s17, 1
      %p73 = por %p71, %p72
      %p74 = scmp.ne.s32.totalorder %s63, %s64
      %p75 = scmp.eq.s32.totalorder %s17, 0
      %p76 = por %p74, %p75
      %p77 = scmp.ne.s32.totalorder %s63, %s64
      %p78 = scmp.eq.s32.totalorder %s18, 1
      %p79 = por %p77, %p78
      %p81 = scmp.ne.s32.totalorder %s64, %s80
      %p82 = scmp.eq.s32.totalorder %s18, 0
      %p83 = por %p81, %p82
      %s84 = ssub.s32 %s19, %s31
      %p85 = scmp.eq.s32.totalorder %s84, 0
      %s87 = sadd.s32 %s86, 1
      %s88 = scalar_select %p85, %s86, %s87
      %p91 = pneg %p85
      %p92 = scmp.eq.s32.totalorder %s12, 1
      %p93 = por %p91, %p92
      %p94 = scmp.ne.s32.totalorder %s86, %s89
      %p95 = scmp.eq.s32.totalorder %s12, 0
      %p96 = por %p94, %p95
      %p97 = scmp.ne.s32.totalorder %s86, %s89
      %p98 = scmp.eq.s32.totalorder %s17, 1
      %p99 = por %p97, %p98
      %p100 = scmp.ne.s32.totalorder %s89, %s90
      %p101 = scmp.eq.s32.totalorder %s17, 0
      %p102 = por %p100, %p101
      %p103 = scmp.ne.s32.totalorder %s89, %s90
      %p104 = scmp.eq.s32.totalorder %s18, 1
      %p105 = por %p103, %p104
      %p107 = scmp.ne.s32.totalorder %s90, %s106
      %p108 = scmp.eq.s32.totalorder %s18, 0
      %p109 = por %p107, %p108
      %s110 = ssub.s32 %s19, %s31
      %s111 = ssub.s32 %s20, %s27
      %s112 = sor.u32 %s110, %s111
      %p113 = scmp.eq.s32.totalorder %s112, 0
      %s115 = sadd.s32 %s114, 1
      %s116 = scalar_select %p113, %s114, %s115
      %p119 = pneg %p113
      %p120 = scmp.eq.s32.totalorder %s12, 1
      %p121 = por %p119, %p120
      %p122 = scmp.ne.s32.totalorder %s114, %s117
      %p123 = scmp.eq.s32.totalorder %s12, 0
      %p124 = por %p122, %p123
      %p125 = scmp.ne.s32.totalorder %s114, %s117
      %p126 = scmp.eq.s32.totalorder %s17, 1
      %p127 = por %p125, %p126
      %p128 = scmp.ne.s32.totalorder %s117, %s118
      %p129 = scmp.eq.s32.totalorder %s17, 0
      %p130 = por %p128, %p129
      %p131 = scmp.ne.s32.totalorder %s117, %s118
      %p132 = scmp.eq.s32.totalorder %s18, 1
      %p133 = por %p131, %p132
      %p135 = scmp.ne.s32.totalorder %s118, %s134
      %p136 = scmp.eq.s32.totalorder %s18, 0
      %p137 = por %p135, %p136
      %p138 = scmp.le.s32.totalorder 1, %s12
      %p139 = scmp.lt.s32.totalorder %s12, 3
      %p140 = pnand %p138, %p139
      %p141 = pneg %p140
      // Predicated region
      $region9: #{cosface.1} parent=5 // pred_check
        _
      $region10: #{cosface.1} parent=5 // pred_check_branch
        %143 = sbr.rel (%p140) target = $region12
      $region11: #{cosface.1} parent=5 // pred_region
        %s144 = ssub.s32 %s12, 1
        // Predicated region
        $region13: #{cosface.1} parent=11 // pred_check
          %p145 = pneg %p50
        $region14: #{cosface.1} parent=11 // pred_check_branch
          %147 = sbr.rel (%p145) target = $region16
        $region15: #{cosface.1} parent=11 // pred_region
          %s148 = smul.u32 2, %s21
          %p149 = scmp.lt.s32.totalorder %s148, 1
          %s150 = scalar_select %p149, %s148, 1
          %s151 = smul.addr %s150, 2
          %s152 = smul.addr %s151, 4
          %s153 = scalar_lea.vmem %s0, %s152
          %s154 = smul.u32 2, %s21
        $region16: #{cosface.1} parent=11 // pred_fallthru
          _
        // Predicated region
        $region17: #{cosface.1} parent=11 // pred_check
          %p155 = pneg %p102
        $region18: #{cosface.1} parent=11 // pred_check_branch
          %157 = sbr.rel (%p155) target = $region20
        $region19: #{cosface.1} parent=11 // pred_region
          %s158 = smul.u32 2, %s21
          %p159 = scmp.lt.s32.totalorder %s158, 1
          %s160 = scalar_select %p159, %s158, 1
          %s161 = smul.addr %s160, 8
          %s162 = scalar_lea.vmem %s2, %s161
          %s163 = smul.u32 2, %s21
        $region20: #{cosface.1} parent=11 // pred_fallthru
          _
      $region12: #{cosface.1} parent=5 // pred_fallthru
        _
      %p164 = scmp.lt.s32.totalorder %s12, 2
      // Predicated region
      $region21: #{cosface.1} parent=5 // pred_check
        %p165 = pneg %p164
      $region22: #{cosface.1} parent=5 // pred_check_branch
        %167 = sbr.rel (%p165) target = $region24
      $region23: #{cosface.1} parent=5 // pred_region
        // Predicated region
        $region25: #{cosface.1} parent=23 // pred_check
          %p168 = pneg %p70
        $region26: #{cosface.1} parent=23 // pred_check_branch
          %170 = sbr.rel (%p168) target = $region28
        $region27: #{cosface.1} parent=23 // pred_region
          %s171 = smul.u32 32, %s20
          %p172 = scmp.lt.s32.totalorder %s171, 63
          %s173 = scalar_select %p172, %s171, 63
          %s174 = smul.addr %s173, 2
          %s175 = smul.addr %s174, 4
          %s176 = scalar_lea.vmem %s1, %s175
          %s177 = smul.u32 32, %s20
        $region28: #{cosface.1} parent=23 // pred_fallthru
          _
      $region24: #{cosface.1} parent=5 // pred_fallthru
        _
      %p178 = scmp.le.s32.totalorder 1, %s12
      %p179 = scmp.lt.s32.totalorder %s12, 3
      %p180 = pnand %p178, %p179
      %p181 = pneg %p180
      // Predicated region
      $region29: #{cosface.1} parent=5 // pred_check
        _
      $region30: #{cosface.1} parent=5 // pred_check_branch
        %183 = sbr.rel (%p180) target = $region32
      $region31: #{cosface.1} parent=5 // pred_region
        %s184 = ssub.s32 %s12, 1
        %s185 = smul.u32 2, %s21
        %p186 = scmp.lt.s32.totalorder %s185, 1
        %s187 = scalar_select %p186, %s185, 1
        %s188 = smul.addr %s187, 2
        %s189 = smul.addr %s188, 4
        %s190 = scalar_lea.vmem %s0, %s189
        %p191 = pneg %p50
        %p192 = pneg %p47
        %s193 = smul.u32 32, %s22
        %p194 = scmp.lt.s32.totalorder %s193, 63
        %s195 = scalar_select %p194, %s193, 63
        %s196 = smul.addr %s195, 2
        %s197 = smul.addr %s196, 4
        %s198 = scalar_lea.vmem %s1, %s197
        %p199 = pneg %p76
        %p200 = pneg %p73
        %s201 = smul.u32 2, %s21
        %p202 = scmp.lt.s32.totalorder %s201, 1
        %s203 = scalar_select %p202, %s201, 1
        %s204 = smul.addr %s203, 8
        %s205 = scalar_lea.vmem %s2, %s204
        %p206 = pneg %p102
        %p207 = pneg %p99
        %p208 = pneg %p130
        %p209 = pneg %p127
        %s210 = sand.u32 %s117, 1
        %s211 = scalar_lea.sflag [#allocation3], %s210
        %s212 = sand.u32 %s117, 1
        %s213 = smul.addr %s212, 32
        %s214 = scalar_lea.vmem [#allocation2], %s213
        %s215 = smul.u32 2, %s21
        %p216 = scmp.lt.s32.totalorder %s215, 1
        %s217 = scalar_select %p216, %s215, 1
        %s218 = smul.addr %s217, 2
        %s219 = smul.addr %s218, 4
        %s220 = scalar_lea.vmem %s0, %s219
        %s221 = smul.u32 2, %s21
        %s222 = smul.u32 32, %s22
        %p223 = scmp.lt.s32.totalorder %s222, 63
        %s224 = scalar_select %p223, %s222, 63
        %s225 = smul.addr %s224, 2
        %s226 = smul.addr %s225, 4
        %s227 = scalar_lea.vmem %s1, %s226
        %s228 = smul.u32 32, %s22
        %s229 = smul.u32 2, %s21
        %p230 = scmp.lt.s32.totalorder %s229, 1
        %s231 = scalar_select %p230, %s229, 1
        %s232 = smul.addr %s231, 8
        %s233 = scalar_lea.vmem %s2, %s232
        %s234 = smul.u32 2, %s21
        %s235 = smul.u32 2, %s21
        %s236 = smul.u32 2, %s22
        %v237 = vld [vmem:[%s220] sm:$0xff]
        %v238 = vld [vmem:[%s220 + $0x8] sm:$0xff]
        %v239 = vld [vmem:[%s227] sm:$0xff]
        %v240 = vld [vmem:[%s227 + $0x8] sm:$0xff]
        %v241 = vld [vmem:[%s227 + $0x10] sm:$0xff]
        %v242 = vld [vmem:[%s227 + $0x18] sm:$0xff]
        %v243 = vld [vmem:[%s227 + $0x20] sm:$0xff]
        %v244 = vld [vmem:[%s227 + $0x28] sm:$0xff]
        %v245 = vld [vmem:[%s227 + $0x30] sm:$0xff]
        %v246 = vld [vmem:[%s227 + $0x38] sm:$0xff]
        %v247 = vld [vmem:[%s227 + $0x40] sm:$0xff]
        %v248 = vld [vmem:[%s227 + $0x48] sm:$0xff]
        %v249 = vld [vmem:[%s227 + $0x50] sm:$0xff]
        %v250 = vld [vmem:[%s227 + $0x58] sm:$0xff]
        %v251 = vld [vmem:[%s227 + $0x60] sm:$0xff]
        %v252 = vld [vmem:[%s227 + $0x68] sm:$0xff]
        %v253 = vld [vmem:[%s227 + $0x70] sm:$0xff]
        %v254 = vld [vmem:[%s227 + $0x78] sm:$0xff]
        %v255 = vld [vmem:[%s227 + $0x80] sm:$0xff]
        %v256 = vld [vmem:[%s227 + $0x88] sm:$0xff]
        %v257 = vld [vmem:[%s227 + $0x90] sm:$0xff]
        %v258 = vld [vmem:[%s227 + $0x98] sm:$0xff]
        %v259 = vld [vmem:[%s227 + $0xa0] sm:$0xff]
        %v260 = vld [vmem:[%s227 + $0xa8] sm:$0xff]
        %v261 = vld [vmem:[%s227 + $0xb0] sm:$0xff]
        %v262 = vld [vmem:[%s227 + $0xb8] sm:$0xff]
        %v263 = vld [vmem:[%s227 + $0xc0] sm:$0xff]
        %v264 = vld [vmem:[%s227 + $0xc8] sm:$0xff]
        %v265 = vld [vmem:[%s227 + $0xd0] sm:$0xff]
        %v266 = vld [vmem:[%s227 + $0xd8] sm:$0xff]
        %v267 = vld [vmem:[%s227 + $0xe0] sm:$0xff]
        %v268 = vld [vmem:[%s227 + $0xe8] sm:$0xff]
        %v269 = vld [vmem:[%s227 + $0xf0] sm:$0xff]
        %v270 = vld [vmem:[%s227 + $0xf8] sm:$0xff]
        %v273 = vunpack.c.l.b16 %v237
        %v274 = vunpack.c.h.b16 %v237
        %v275 = vunpack.c.l.b16 %v238
        %v276 = vunpack.c.h.b16 %v238
        %v277 = vpack.c.b16 %v275, %v273
        %v278 = vpack.c.b16 %v276, %v274
        %v313 = vunpack.c.l.b16 %v239
        %v314 = vunpack.c.h.b16 %v239
        %v315 = vunpack.c.l.b16 %v240
        %v316 = vunpack.c.h.b16 %v240
        %v317 = vunpack.c.l.b16 %v241
        %v318 = vunpack.c.h.b16 %v241
        %v319 = vunpack.c.l.b16 %v242
        %v320 = vunpack.c.h.b16 %v242
        %v321 = vunpack.c.l.b16 %v243
        %v322 = vunpack.c.h.b16 %v243
        %v323 = vunpack.c.l.b16 %v244
        %v324 = vunpack.c.h.b16 %v244
        %v325 = vunpack.c.l.b16 %v245
        %v326 = vunpack.c.h.b16 %v245
        %v327 = vunpack.c.l.b16 %v246
        %v328 = vunpack.c.h.b16 %v246
        %v329 = vunpack.c.l.b16 %v247
        %v330 = vunpack.c.h.b16 %v247
        %v331 = vunpack.c.l.b16 %v248
        %v332 = vunpack.c.h.b16 %v248
        %v333 = vunpack.c.l.b16 %v249
        %v334 = vunpack.c.h.b16 %v249
        %v335 = vunpack.c.l.b16 %v250
        %v336 = vunpack.c.h.b16 %v250
        %v337 = vunpack.c.l.b16 %v251
        %v338 = vunpack.c.h.b16 %v251
        %v339 = vunpack.c.l.b16 %v252
        %v340 = vunpack.c.h.b16 %v252
        %v341 = vunpack.c.l.b16 %v253
        %v342 = vunpack.c.h.b16 %v253
        %v343 = vunpack.c.l.b16 %v254
        %v344 = vunpack.c.h.b16 %v254
        %v345 = vunpack.c.l.b16 %v255
        %v346 = vunpack.c.h.b16 %v255
        %v347 = vunpack.c.l.b16 %v256
        %v348 = vunpack.c.h.b16 %v256
        %v349 = vunpack.c.l.b16 %v257
        %v350 = vunpack.c.h.b16 %v257
        %v351 = vunpack.c.l.b16 %v258
        %v352 = vunpack.c.h.b16 %v258
        %v353 = vunpack.c.l.b16 %v259
        %v354 = vunpack.c.h.b16 %v259
        %v355 = vunpack.c.l.b16 %v260
        %v356 = vunpack.c.h.b16 %v260
        %v357 = vunpack.c.l.b16 %v261
        %v358 = vunpack.c.h.b16 %v261
        %v359 = vunpack.c.l.b16 %v262
        %v360 = vunpack.c.h.b16 %v262
        %v361 = vunpack.c.l.b16 %v263
        %v362 = vunpack.c.h.b16 %v263
        %v363 = vunpack.c.l.b16 %v264
        %v364 = vunpack.c.h.b16 %v264
        %v365 = vunpack.c.l.b16 %v265
        %v366 = vunpack.c.h.b16 %v265
        %v367 = vunpack.c.l.b16 %v266
        %v368 = vunpack.c.h.b16 %v266
        %v369 = vunpack.c.l.b16 %v267
        %v370 = vunpack.c.h.b16 %v267
        %v371 = vunpack.c.l.b16 %v268
        %v372 = vunpack.c.h.b16 %v268
        %v373 = vunpack.c.l.b16 %v269
        %v374 = vunpack.c.h.b16 %v269
        %v375 = vunpack.c.l.b16 %v270
        %v376 = vunpack.c.h.b16 %v270
        %v377 = vpack.c.b16 %v315, %v313
        %v378 = vpack.c.b16 %v316, %v314
        %v379 = vpack.c.b16 %v319, %v317
        %v380 = vpack.c.b16 %v320, %v318
        %v381 = vpack.c.b16 %v323, %v321
        %v382 = vpack.c.b16 %v324, %v322
        %v383 = vpack.c.b16 %v327, %v325
        %v384 = vpack.c.b16 %v328, %v326
        %v385 = vpack.c.b16 %v331, %v329
        %v386 = vpack.c.b16 %v332, %v330
        %v387 = vpack.c.b16 %v335, %v333
        %v388 = vpack.c.b16 %v336, %v334
        %v389 = vpack.c.b16 %v339, %v337
        %v390 = vpack.c.b16 %v340, %v338
        %v391 = vpack.c.b16 %v343, %v341
        %v392 = vpack.c.b16 %v344, %v342
        %v393 = vpack.c.b16 %v347, %v345
        %v394 = vpack.c.b16 %v348, %v346
        %v395 = vpack.c.b16 %v351, %v349
        %v396 = vpack.c.b16 %v352, %v350
        %v397 = vpack.c.b16 %v355, %v353
        %v398 = vpack.c.b16 %v356, %v354
        %v399 = vpack.c.b16 %v359, %v357
        %v400 = vpack.c.b16 %v360, %v358
        %v401 = vpack.c.b16 %v363, %v361
        %v402 = vpack.c.b16 %v364, %v362
        %v403 = vpack.c.b16 %v367, %v365
        %v404 = vpack.c.b16 %v368, %v366
        %v405 = vpack.c.b16 %v371, %v369
        %v406 = vpack.c.b16 %v372, %v370
        %v407 = vpack.c.b16 %v375, %v373
        %v408 = vpack.c.b16 %v376, %v374
        %441 = vmatprep.subr.bf16.mxu0 %v378
        %442 = vmatpush1.bf16.xpose.msra.mxu0 %v377
        %443 = vmatprep.subr.bf16.mxu0 %v380
        %444 = vmatpush1.bf16.xpose.msra.mxu0 %v379
        %445 = vmatprep.subr.bf16.mxu0 %v382
        %446 = vmatpush1.bf16.xpose.msra.mxu0 %v381
        %447 = vmatprep.subr.bf16.mxu0 %v384
        %448 = vmatpush1.bf16.xpose.msra.mxu0 %v383
        %449 = vmatprep.subr.bf16.mxu0 %v386
        %450 = vmatpush1.bf16.xpose.msra.mxu0 %v385
        %451 = vmatprep.subr.bf16.mxu0 %v388
        %452 = vmatpush1.bf16.xpose.msra.mxu0 %v387
        %453 = vmatprep.subr.bf16.mxu0 %v390
        %454 = vmatpush1.bf16.xpose.msra.mxu0 %v389
        %455 = vmatprep.subr.bf16.mxu0 %v392
        %456 = vmatpush1.bf16.xpose.msra.mxu0 %v391
        %457 = vmatprep.subr.bf16.mxu0 %v394
        %458 = vmatpush1.bf16.xpose.msra.mxu0 %v393
        %459 = vmatprep.subr.bf16.mxu0 %v396
        %460 = vmatpush1.bf16.xpose.msra.mxu0 %v395
        %461 = vmatprep.subr.bf16.mxu0 %v398
        %462 = vmatpush1.bf16.xpose.msra.mxu0 %v397
        %463 = vmatprep.subr.bf16.mxu0 %v400
        %464 = vmatpush1.bf16.xpose.msra.mxu0 %v399
        %465 = vmatprep.subr.bf16.mxu0 %v402
        %466 = vmatpush1.bf16.xpose.msra.mxu0 %v401
        %467 = vmatprep.subr.bf16.mxu0 %v404
        %468 = vmatpush1.bf16.xpose.msra.mxu0 %v403
        %469 = vmatprep.subr.bf16.mxu0 %v406
        %470 = vmatpush1.bf16.xpose.msra.mxu0 %v405
        %471 = vmatprep.subr.bf16.mxu0 %v408
        %472 = vmatpush1.bf16.xpose.msra.mxu0 %v407
        %473 = vmatprep.mubr.bf16.mxu0 %v278
        %474 = vmatmul.mubr.bf16.gmra.mrb[0].mxu0 %v277
        %v475 = vpop.f32.mrb[0].mxu0
        %v476 = vadd.f32 0.0, %v475
        %v477 = vpop.f32.mrb[0].mxu0
        %v478 = vadd.f32 0.0, %v477
        %v479 = vpop.f32.mrb[0].mxu0
        %v480 = vadd.f32 0.0, %v479
        %v481 = vpop.f32.mrb[0].mxu0
        %v482 = vadd.f32 0.0, %v481
        %483 = vdwg.mxu0
        %v484 = vlaneseq
        %v485 = vand.u32 %v484, 127
        %v486 = vadd.s32 %v485, 128
        %s487 = smul.u32 %s22, 256
        %v488 = vstv %s487
        %v489 = vadd.s32 %v485, %v488
        %v490 = vadd.s32 %v486, %v488
        %v491 = vld [vmem:[%s233] sm:$0xff]
        %v492 = vld [vmem:[%s233 + $0x8] sm:$0xff]
        %493 = vset.pattern.permute.xlu0 0
        %494 = vperm.xlu0 %493, %v491
        %v495 = vpop.permute.xlu0 %494
        %496 = vset.pattern.permute.xlu0 0
        %497 = vperm.xlu0 %496, %v492
        %v498 = vpop.permute.xlu0 %497
        %vm499 = vcmp.eq.s32.totalorder %v489, %v495
        %vm500 = vcmp.eq.s32.totalorder %v490, %v495
        %vm501 = vcmp.eq.s32.totalorder %v489, %v498
        %vm502 = vcmp.eq.s32.totalorder %v490, %v498
        %v503 = vsub.f32 %v476, 0.35
        %v504 = vsub.f32 %v478, 0.35
        %v505 = vsub.f32 %v480, 0.35
        %v506 = vsub.f32 %v482, 0.35
        %v507 = vsel %vm499, %v503, %v476
        %v508 = vsel %vm500, %v504, %v478
        %v509 = vsel %vm501, %v505, %v480
        %v510 = vsel %vm502, %v506, %v482
        %v511 = vmul.f32 %v507, 64.0
        %v512 = vmul.f32 %v508, 64.0
        %v513 = vmul.f32 %v509, 64.0
        %v514 = vmul.f32 %v510, 64.0
        %515 = vst [vmem:[%s214] sm:$0xff] %v511
        %516 = vst [vmem:[%s214 + $0x8] sm:$0xff] %v512
        %517 = vst [vmem:[%s214 + $0x10] sm:$0xff] %v513
        %518 = vst [vmem:[%s214 + $0x18] sm:$0xff] %v514
        %s519 = sand.u32 %s117, 1
        %s520 = scalar_lea.sflag [#allocation3], %s519
        %s521 = sand.u32 %s117, 1
        %s522 = smul.addr %s521, 32
        %s523 = scalar_lea.vmem [#allocation2], %s522
        // Predicated region
        $region33: #{cosface.1} parent=31 // pred_check
          %p524 = pneg %p127
        $region34: #{cosface.1} parent=31 // pred_check_branch
          %526 = sbr.rel (%p524) target = $region36
        $region35: #{cosface.1} parent=31 // pred_region
          %s527 = smul.u32 2, %s21
          %s528 = smul.u32 2, %s22
          %s530 = ssub.s32 512, 512
          %531 = vsyncadd %s520, %s530
          %s532 = smul.addr %s527, 4
          %s533 = sadd.s32 %s528, %s532
          %s534 = smul.addr %s533, 128
          %s535 = scalar_lea.hbm %s3, %s534
          %s536 = sshll.u32 %s523, 4
          %s537 = int_to_ptr.vmem [resolvable:$true] %s536
          %542 = dma.vmem_to_hbm [thread:$0]  %s537, 512, %s535, %s520, 256, 512, 16
        $region36: #{cosface.1} parent=31 // pred_fallthru
          _
      $region32: #{cosface.1} parent=5 // pred_fallthru
        _
      %p543 = scmp.le.s32.totalorder 2, %s12
      // Predicated region
      $region37: #{cosface.1} parent=5 // pred_check
        %p544 = pneg %p543
      $region38: #{cosface.1} parent=5 // pred_check_branch
        %546 = sbr.rel (%p544) target = $region40
      $region39: #{cosface.1} parent=5 // pred_region
        %s547 = ssub.s32 %s12, 2
        // Predicated region
        $region41: #{cosface.1} parent=39 // pred_check
          %p548 = pneg %p133
        $region42: #{cosface.1} parent=39 // pred_check_branch
          %550 = sbr.rel (%p548) target = $region44
        $region43: #{cosface.1} parent=39 // pred_region
          %s551 = sand.u32 %s118, 1
          %s552 = scalar_lea.sflag [#allocation3], %s551
          %s553 = sand.u32 %s118, 1
          %s554 = smul.addr %s553, 32
          %s555 = scalar_lea.vmem [#allocation2], %s554
          %556 = dma.done %s552, 512
        $region44: #{cosface.1} parent=39 // pred_fallthru
          _
      $region40: #{cosface.1} parent=5 // pred_fallthru
        _
    $region6: #{cosface.1} parent=1 // loop_footer
      %s16 = sadd.s32 1, %s12
    $region7: #{cosface.1} parent=1 // loop_footer_branch
      %11 = sbr.rel target = $region3
    $region8: #{cosface.1} parent=1 // loop_exit
      _
    %557 = vsyncpa [#allocation3], 1
    %s558 = scalar_lea.sflag [#allocation3], 1
    %559 = vsyncpa %s558, 1

</llo_original>
